<compile_context>
chip_gen: v7x
topology: tpu7x:2x2x1
jax: 0.10.0
libtpu: 0.0.40
codegen_flags: <defaults>
</compile_context>

<pallas_src>
import jax
import jax.numpy as jnp
import numpy as np
from jax.experimental import pallas as pl
from jax.experimental.pallas import tpu as pltpu


def _copy_kernel(w_ref, o_ref):
    # Element-wise pass-through of one lane-dense tile of the image parameter.
    o_ref[...] = w_ref[...]


def _min_sublane(itemsize: int) -> int:
    # Minimum sublane tile per dtype width: f32 -> 8, bf16 -> 16, int8 -> 32.
    return 8 * max(1, 4 // itemsize)


def _lane_dense_view(total: int, sublane: int):
    """Pick a (rows, lanes) factorization that is (sublane, 128)-tileable."""
    for lanes in (4096, 2048, 1024, 512, 256, 128):
        if total % lanes == 0 and (total // lanes) % sublane == 0:
            return total // lanes, lanes
    # Fallback 1: lane-dense (lanes=128) but ragged row count -> handled as a
    # single full-extent block below.  Realistic image sizes hit the loop.
    if total % 128 == 0:
        return total // 128, 128
    # Fallback 2: tiny / odd sizes -> one full-extent row block.
    return 1, total


def _choose_row_tile(rows: int, lanes: int, itemsize: int, sublane: int) -> int:
    """Largest divisor of `rows` that is a multiple of `sublane`, keeps the
    tile under a v5e-safe byte budget, and (when more than one tile is needed)
    yields an even grid length so v7x's two TensorCores get balanced work."""
    if rows % sublane != 0:
        return rows  # full-extent block (block dims == array dims is legal)
    # 1 in + 1 out, double-buffered => 4 live tiles.  3 MiB tiles -> 12 MiB
    # live, under the 16 MiB v5e scoped-VMEM default (v6e/v7x default 32 MiB);
    # copy-class kernels already sit near HBM roofline at this size.
    target_bytes = 3 * 1024 * 1024
    max_rows = (target_bytes // (lanes * itemsize)) // sublane * sublane
    max_rows = max(sublane, max_rows)
    if rows <= max_rows:
        return rows  # single grid step
    cands = [d for d in range(sublane, max_rows + 1, sublane) if rows % d == 0]
    even = [d for d in cands if (rows // d) % 2 == 0]
    return max(even) if even else max(cands)


def _identity_copy(weight: jax.Array) -> jax.Array:
    """Explicit Pallas lane-dense identity copy of the image parameter."""
    orig_shape = weight.shape
    total = weight.size
    itemsize = jnp.dtype(weight.dtype).itemsize
    sublane = _min_sublane(itemsize)
    rows, lanes = _lane_dense_view(total, sublane)
    flat = weight.reshape(rows, lanes)  # contiguous -> free reshape

    row_tile = _choose_row_tile(rows, lanes, itemsize, sublane)
    grid = (rows // row_tile,)

    out_flat = pl.pallas_call(
        _copy_kernel,
        out_shape=jax.ShapeDtypeStruct((rows, lanes), weight.dtype),
        grid=grid,
        in_specs=[pl.BlockSpec((row_tile, lanes), lambda i: (i, 0))],
        out_specs=pl.BlockSpec((row_tile, lanes), lambda i: (i, 0)),
        cost_estimate=pl.CostEstimate(
            flops=0,
            transcendentals=0,
            bytes_accessed=2 * total * itemsize,
        ),
        compiler_params=pltpu.CompilerParams(
            dimension_semantics=("parallel",),
        ),
    )(flat)
    return out_flat.reshape(orig_shape)


def generated_image_forward(weight: jax.Array,
                            *, materialize_with_kernel: bool = False) -> jax.Array:
    """Forward pass of GenerateedImage: returns the image parameter.

    Default path: pure pass-through (`return weight`) — the optimal forward,
    zero HBM traffic.  Set `materialize_with_kernel=True` to run the explicit
    Pallas copy kernel (fresh output buffer with identical values).
    """
    if not materialize_with_kernel:
        return weight
    return _identity_copy(weight)


if __name__ == "__main__":
    # Deterministic parameter init (stand-in for torch.rand(*img_shape)).
    img_shape = (2, 4, 16, 16)  # (N, C, H, W)
    key = jax.random.PRNGKey(0)
    weight = jax.random.uniform(key, img_shape, dtype=jnp.float32)

    # Host snapshot for verification.
    expected = np.asarray(weight)

    # 1) Default (optimal) forward: zero-cost pass-through of the parameter.
    out_fast = jax.block_until_ready(generated_image_forward(weight))
    assert out_fast.shape == img_shape
    assert out_fast.dtype == jnp.float32
    assert np.array_equal(np.asarray(out_fast), expected)

    # 2) Explicit Pallas kernel path: run once and verify bit-exact identity.
    out_kernel = jax.block_until_ready(
        generated_image_forward(weight, materialize_with_kernel=True))
    assert out_kernel.shape == img_shape
    assert out_kernel.dtype == jnp.float32
    assert np.array_equal(np.asarray(out_kernel), expected)

    print("KERNEL_OK")
</pallas_src>

<mosaic_0001>
module attributes {stable_mosaic.version = 11 : i64} {
  func.func @_copy_kernel(%arg0: i32, %arg1: memref<8x256xf32, #tpu.memory_space<vmem>>, %arg2: memref<8x256xf32, #tpu.memory_space<vmem>>) attributes {dimension_semantics = [#tpu.dimension_semantics<parallel>], iteration_bounds = array<i64: 1>, scalar_prefetch = 0 : i64, scratch_operands = 0 : i64, tpu.core_type = #tpu.core_type<tc>, window_params = [{transform_indices = @transform_0, window_bounds = array<i64: 8, 256>}, {transform_indices = @transform_1, window_bounds = array<i64: 8, 256>}]} {
    %c0 = arith.constant 0 : index
    %c0_0 = arith.constant 0 : index
    %0 = vector.load %arg1[%c0, %c0_0] : memref<8x256xf32, #tpu.memory_space<vmem>>, vector<8x256xf32>
    %c0_1 = arith.constant 0 : index
    %c0_2 = arith.constant 0 : index
    %1 = vector.load %arg2[%c0_1, %c0_2] : memref<8x256xf32, #tpu.memory_space<vmem>>, vector<8x256xf32>
    tpu.vector_store %arg2[%c0_1, %c0_2], %0 {strides = array<i32>} : memref<8x256xf32, #tpu.memory_space<vmem>>, vector<8x256xf32>,
    return
  }
  func.func @transform_0(%arg0: i32) -> (i32, i32) {
    %c0_i32 = arith.constant 0 : i32
    %c0_i32_0 = arith.constant 0 : i32
    return %arg0, %c0_i32 : i32, i32
  }
  func.func @transform_1(%arg0: i32) -> (i32, i32) {
    %c0_i32 = arith.constant 0 : i32
    %c0_i32_0 = arith.constant 0 : i32
    return %arg0, %c0_i32 : i32, i32
  }
}

</mosaic_0001>

<llo_original>
// kernel: tpu_custom_call.1
$region0: #{tpu_custom_call.1}
  #allocation0 [shape = 'u32[]', space=smem, size = 0x4, offset = 0x4, fixed_abs, tag = 'smem constant byte address 0x4 - core index']
  #allocation1 [shape = 'u32[144,128]{1,0:T(1,128)}', space=vmem, size = 0x12000, scoped, tag = 'internal scratch']
  %s0 = inlined_call_operand.hbm [shape: f32[8,256], index: 0, kind: input, shape index: {}]
  %s1 = inlined_call_operand.hbm [shape: f32[8,256], index: 1, kind: output, shape index: {}]
  %s2 = sld [smem:[#allocation0]]
  $region18: #{tpu_custom_call.1} parent=0
    _
  %s4 = ssub.s32 1, %s2
  %s5 = scalar_select 0, %s4, %s2
  $region1: #{tpu_custom_call.1} parent=0
    #allocation2 [shape = 'u8[8192]{0}', space=vmem, size = 0x2000, scoped, tag = 'input window, operand 0, single buffered']
    #allocation3 [shape = 's32[1]{0}', space=sflag, size = 0x4, scoped, tag = 'scoped memory for tpu_custom_call.1']
    #allocation4 [shape = 's32[1]{0}', space=sflag, size = 0x4, scoped, tag = 'scoped memory for tpu_custom_call.1']
    #allocation5 [shape = 'u8[8192]{0}', space=vmem, size = 0x2000, scoped, tag = 'output window, operand 0, single buffered']
    %6 = vsyncpa [#allocation3], 0
    %7 = vsyncpa [#allocation4], 0
    // Predicated region
    $region2: #{tpu_custom_call.1} parent=1 // pred_check
      _
    $region3: #{tpu_custom_call.1} parent=1 // pred_check_branch
      %9 = sbr.rel (0) target = $region5
    $region4: #{tpu_custom_call.1} parent=1 // pred_region
      %s11 = ssub.s32 256, 256
      %12 = vsyncadd [#allocation3], %s11
      %s14 = sshll.u32 [#allocation2], 4
      %s15 = int_to_ptr.vmem [resolvable:$true] %s14
      %17 = dma.hbm_to_vmem [thread:$0]  %s0, 256, %s15, [#allocation3]
    $region5: #{tpu_custom_call.1} parent=1 // pred_fallthru
      _
    // Predicated region
    $region6: #{tpu_custom_call.1} parent=1 // pred_check
      _
    $region7: #{tpu_custom_call.1} parent=1 // pred_check_branch
      %19 = sbr.rel (0) target = $region9
    $region8: #{tpu_custom_call.1} parent=1 // pred_region
      %20 = dma.done [#allocation3], 256
    $region9: #{tpu_custom_call.1} parent=1 // pred_fallthru
      _
    %v21 = vld [vmem:[#allocation2] sm:$0xff]
    %v22 = vld [vmem:[#allocation2 + $0x8] sm:$0xff]
    %23 = vst [vmem:[#allocation5] sm:$0xff] %v21
    %24 = vst [vmem:[#allocation5 + $0x8] sm:$0xff] %v22
    // Predicated region
    $region10: #{tpu_custom_call.1} parent=1 // pred_check
      _
    $region11: #{tpu_custom_call.1} parent=1 // pred_check_branch
      %26 = sbr.rel (0) target = $region13
    $region12: #{tpu_custom_call.1} parent=1 // pred_region
      %s28 = ssub.s32 256, 256
      %29 = vsyncadd [#allocation4], %s28
      %s31 = sshll.u32 [#allocation5], 4
      %s32 = int_to_ptr.vmem [resolvable:$true] %s31
      %34 = dma.vmem_to_hbm [thread:$0]  %s32, 256, %s1, [#allocation4]
    $region13: #{tpu_custom_call.1} parent=1 // pred_fallthru
      _
    // Predicated region
    $region14: #{tpu_custom_call.1} parent=1 // pred_check
      _
    $region15: #{tpu_custom_call.1} parent=1 // pred_check_branch
      %36 = sbr.rel (0) target = $region17
    $region16: #{tpu_custom_call.1} parent=1 // pred_region
      %37 = dma.done [#allocation4], 256
    $region17: #{tpu_custom_call.1} parent=1 // pred_fallthru
      _
    %38 = vsyncpa [#allocation3], 1
    %39 = vsyncpa [#allocation4], 1

</llo_original>
